<compile_context>
chip_gen: v7x
topology: tpu7x:2x2x1
jax: 0.10.0
libtpu: 0.0.40
codegen_flags: <defaults>
</compile_context>

<pallas_src>
import functools

import jax
import jax.numpy as jnp
from jax.experimental import pallas as pl
from jax.experimental.pallas import tpu as pltpu


def _round_up(x, m):
    return (x + m - 1) // m * m


def _netlist_kernel(idx_ref, x_ref, slab_ref, o_ref, *, d, h1, h2):
    """One dispatch query: o = MLP_{idx}(x).

    idx_ref : [Q] int32 in SMEM (scalar prefetch; selection already happened
              in the slab index_map, so it is unused here).
    x_ref   : [B, D]   selected query input.
    slab_ref: [R, L]   packed parameters of the selected model.
    o_ref   : [B, 1]   output.
    """
    del idx_ref
    x = x_ref[...]                                           # [B, D]

    r_w2 = d
    r_b1 = d + h1

    w1 = slab_ref[0:d, 0:h1]                                 # [D, H1]
    w2 = slab_ref[r_w2:r_w2 + h1, 0:h2]                      # [H1, H2]
    b1 = slab_ref[r_b1:r_b1 + 1, 0:h1]                       # [1, H1]
    b2 = slab_ref[r_b1 + 1:r_b1 + 2, 0:h2]                   # [1, H2]
    w3 = slab_ref[r_b1 + 2:r_b1 + 3, 0:h2]                   # [1, H2] (row)
    b3 = slab_ref[r_b1 + 3:r_b1 + 4, 0:1]                    # [1, 1]

    h1a = jnp.dot(x, w1, preferred_element_type=jnp.float32) + b1
    h1a = jnp.maximum(h1a, 0.0)                              # ReLU

    h2a = jnp.dot(h1a, w2, preferred_element_type=jnp.float32) + b2
    h2a = jnp.maximum(h2a, 0.0)                              # ReLU

    # Final layer has out_features=1: keep it off the MXU (VPU mul + XLU lane
    # reduce) instead of an N=1 matmul.
    out = jnp.sum(h2a * w3, axis=-1, keepdims=True) + b3     # [B, 1]
    o_ref[...] = out.astype(o_ref.dtype)


def pack_netlist_params(w1, b1, w2, b2, w3, b3):
    """Pack stacked per-model params into one [M, R, L] slab.

    w1 [M, D, H1], b1 [M, H1], w2 [M, H1, H2], b2 [M, H2],
    w3 [M, H2] (single output row), b3 [M].
    Row layout per model:
      rows [0, D)        : w1
      rows [D, D+H1)     : w2
      row  D+H1          : b1
      row  D+H1+1        : b2
      row  D+H1+2        : w3 (row vector)
      row  D+H1+3        : b3 in column 0
      remaining rows     : zero padding to a multiple of 8 sublanes
    """
    m, d, h1 = w1.shape
    h2 = w2.shape[2]
    lane = max(h1, h2)
    rows = _round_up(d + h1 + 4, 8)

    slab = jnp.zeros((m, rows, lane), jnp.float32)
    slab = slab.at[:, 0:d, 0:h1].set(w1)
    slab = slab.at[:, d:d + h1, 0:h2].set(w2)
    r = d + h1
    slab = slab.at[:, r, 0:h1].set(b1)
    slab = slab.at[:, r + 1, 0:h2].set(b2)
    slab = slab.at[:, r + 2, 0:h2].set(w3)
    slab = slab.at[:, r + 3, 0].set(b3)
    return slab


def netlist_forward_batched(xs, slab, idxs, *, h1, h2):
    """Run models[idxs[q]](xs[q]) for all q in one pallas_call.

    xs   : [Q, B, D] float32
    slab : [M, R, L] packed parameters (see pack_netlist_params)
    idxs : [Q] int   model index per query
    returns [Q, B, 1] float32
    """
    q_total, b, d = xs.shape
    m, rows, lane = slab.shape
    assert rows >= d + h1 + 4 and lane >= max(h1, h2)
    idxs = jnp.asarray(idxs, dtype=jnp.int32)

    kernel = functools.partial(_netlist_kernel, d=d, h1=h1, h2=h2)

    grid_spec = pltpu.PrefetchScalarGridSpec(
        num_scalar_prefetch=1,
        grid=(q_total,),
        in_specs=[
            # Per-query input block.
            pl.BlockSpec((None, b, d), lambda q, idx_ref: (q, 0, 0)),
            # Single packed parameter slab for the selected model (one DMA).
            pl.BlockSpec((None, rows, lane),
                         lambda q, idx_ref: (idx_ref[q], 0, 0)),
        ],
        out_specs=pl.BlockSpec((None, b, 1), lambda q, idx_ref: (q, 0, 0)),
    )

    flops = 2 * q_total * b * (d * h1 + h1 * h2 + h2)
    bytes_accessed = 4 * (xs.size + q_total * rows * lane + q_total * b)
    cost = pl.CostEstimate(flops=flops, transcendentals=0,
                           bytes_accessed=bytes_accessed)

    return pl.pallas_call(
        kernel,
        out_shape=jax.ShapeDtypeStruct((q_total, b, 1), jnp.float32),
        grid_spec=grid_spec,
        compiler_params=pltpu.CompilerParams(
            dimension_semantics=("parallel",)),
        cost_estimate=cost,
    )(idxs, xs, slab)


def netlist_forward(x, slab, idx, *, h1, h2):
    """NetList.forward(x, idx): single-query convenience wrapper."""
    out = netlist_forward_batched(x[None], slab,
                                  jnp.asarray([idx], jnp.int32),
                                  h1=h1, h2=h2)
    return out[0]


def init_netlist_params(key, num_models, input_dim, h1, h2):
    """Deterministic stacked parameters for `num_models` small MLPs."""
    ks = jax.random.split(key, 6)
    s1 = 1.0 / jnp.sqrt(input_dim)
    s2 = 1.0 / jnp.sqrt(h1)
    s3 = 1.0 / jnp.sqrt(h2)
    return {
        "w1": jax.random.uniform(ks[0], (num_models, input_dim, h1),
                                 jnp.float32, -s1, s1),
        "b1": jax.random.uniform(ks[1], (num_models, h1), jnp.float32, -s1, s1),
        "w2": jax.random.uniform(ks[2], (num_models, h1, h2),
                                 jnp.float32, -s2, s2),
        "b2": jax.random.uniform(ks[3], (num_models, h2), jnp.float32, -s2, s2),
        "w3": jax.random.uniform(ks[4], (num_models, h2), jnp.float32, -s3, s3),
        "b3": jax.random.uniform(ks[5], (num_models,), jnp.float32, -s3, s3),
    }


def _reference_forward(x, params, idx):
    """Plain-JAX reference: models[idx](x) -> [B, 1]."""
    w1, b1 = params["w1"][idx], params["b1"][idx]
    w2, b2 = params["w2"][idx], params["b2"][idx]
    w3, b3 = params["w3"][idx], params["b3"][idx]
    h1 = jnp.maximum(x @ w1 + b1, 0.0)
    h2 = jnp.maximum(h1 @ w2 + b2, 0.0)
    return h2 @ w3[:, None] + b3


if __name__ == "__main__":
    key = jax.random.PRNGKey(0)
    k_x, k_p = jax.random.split(key)

    NUM_MODELS = 3      # len(NetList)
    B, D = 8, 16        # batch, input features of each contained MLP
    H1, H2 = 32, 32     # hidden widths
    Q = 4               # number of batched dispatch queries

    xs = jax.random.normal(k_x, (Q, B, D), dtype=jnp.float32)
    params = init_netlist_params(k_p, NUM_MODELS, D, H1, H2)
    slab = pack_netlist_params(params["w1"], params["b1"],
                               params["w2"], params["b2"],
                               params["w3"], params["b3"])

    idxs = jnp.array([1, 0, 2, 1], dtype=jnp.int32)

    # Batched dispatch: Q NetList.forward(x_q, idx_q) calls in one kernel.
    out = netlist_forward_batched(xs, slab, idxs, h1=H1, h2=H2)
    out = jax.block_until_ready(out)

    ref = jnp.stack([_reference_forward(xs[q], params, int(idxs[q]))
                     for q in range(Q)])
    assert out.shape == (Q, B, 1)
    assert jnp.allclose(out, ref, atol=1e-4, rtol=1e-4)

    # Single-query path, identical to NetList.forward(x, idx=1).
    out1 = jax.block_until_ready(netlist_forward(xs[0], slab, 1, h1=H1, h2=H2))
    ref1 = _reference_forward(xs[0], params, 1)
    assert out1.shape == (B, 1)
    assert jnp.allclose(out1, ref1, atol=1e-4, rtol=1e-4)

    print("KERNEL_OK")
</pallas_src>

<mosaic_0001>
module attributes {stable_mosaic.version = 11 : i64} {
  func.func @_netlist_kernel(%arg0: i32, %arg1: memref<4xi32, #tpu.memory_space<smem>>, %arg2: memref<1x8x16xf32, #tpu.memory_space<vmem>>, %arg3: memref<1x56x32xf32, #tpu.memory_space<vmem>>, %arg4: memref<1x8x1xf32, #tpu.memory_space<vmem>>) attributes {dimension_semantics = [#tpu.dimension_semantics<parallel>], iteration_bounds = array<i64: 4>, scalar_prefetch = 1 : i64, scratch_operands = 0 : i64, tpu.core_type = #tpu.core_type<tc>, window_params = [{transform_indices = @transform_0, window_bounds = array<i64: 1, 8, 16>}, {transform_indices = @transform_1, window_bounds = array<i64: 1, 56, 32>}, {transform_indices = @transform_2, window_bounds = array<i64: 1, 8, 1>}]} {
    %c0 = arith.constant 0 : index
    %c0_0 = arith.constant 0 : index
    %c0_1 = arith.constant 0 : index
    %0 = vector.load %arg2[%c0, %c0_0, %c0_1] : memref<1x8x16xf32, #tpu.memory_space<vmem>>, vector<1x8x16xf32>
    %1 = vector.shape_cast %0 : vector<1x8x16xf32> to vector<8x16xf32>
    %c0_2 = arith.constant 0 : index
    %c0_3 = arith.constant 0 : index
    %c0_4 = arith.constant 0 : index
    %2 = vector.load %arg3[%c0_2, %c0_3, %c0_4] : memref<1x56x32xf32, #tpu.memory_space<vmem>>, vector<1x16x32xf32>
    %3 = vector.shape_cast %2 : vector<1x16x32xf32> to vector<16x32xf32>
    %c0_5 = arith.constant 0 : index
    %c16 = arith.constant 16 : index
    %c0_6 = arith.constant 0 : index
    %4 = vector.load %arg3[%c0_5, %c16, %c0_6] : memref<1x56x32xf32, #tpu.memory_space<vmem>>, vector<1x32x32xf32>
    %5 = vector.shape_cast %4 : vector<1x32x32xf32> to vector<32x32xf32>
    %c0_7 = arith.constant 0 : index
    %c48 = arith.constant 48 : index
    %c0_8 = arith.constant 0 : index
    %6 = vector.load %arg3[%c0_7, %c48, %c0_8] : memref<1x56x32xf32, #tpu.memory_space<vmem>>, vector<1x1x32xf32>
    %7 = vector.shape_cast %6 : vector<1x1x32xf32> to vector<1x32xf32>
    %c0_9 = arith.constant 0 : index
    %c49 = arith.constant 49 : index
    %c0_10 = arith.constant 0 : index
    %8 = vector.load %arg3[%c0_9, %c49, %c0_10] : memref<1x56x32xf32, #tpu.memory_space<vmem>>, vector<1x1x32xf32>
    %9 = vector.shape_cast %8 : vector<1x1x32xf32> to vector<1x32xf32>
    %c0_11 = arith.constant 0 : index
    %c50 = arith.constant 50 : index
    %c0_12 = arith.constant 0 : index
    %10 = vector.load %arg3[%c0_11, %c50, %c0_12] : memref<1x56x32xf32, #tpu.memory_space<vmem>>, vector<1x1x32xf32>
    %11 = vector.shape_cast %10 : vector<1x1x32xf32> to vector<1x32xf32>
    %c0_13 = arith.constant 0 : index
    %c51 = arith.constant 51 : index
    %c0_14 = arith.constant 0 : index
    %12 = vector.load %arg3[%c0_13, %c51, %c0_14] : memref<1x56x32xf32, #tpu.memory_space<vmem>>, vector<1x1x1xf32>
    %13 = vector.shape_cast %12 : vector<1x1x1xf32> to vector<1x1xf32>
    %cst = arith.constant dense<0.000000e+00> : vector<8x32xf32>
    %14 = tpu.matmul %1, %3, %cst {dimension_numbers = #tpu.dot_dimension_numbers<[1], [0], [0], [1], [0, 0, 1, 1], [], []>} : vector<8x16xf32>, vector<16x32xf32>, vector<8x32xf32> -> vector<8x32xf32>
    %15 = vector.broadcast %7 : vector<1x32xf32> to vector<8x32xf32>
    %16 = arith.addf %14, %15 : vector<8x32xf32>
    %cst_15 = arith.constant 0.000000e+00 : f32
    %17 = vector.broadcast %cst_15 : f32 to vector<8x32xf32>
    %18 = arith.maximumf %16, %17 : vector<8x32xf32>
    %cst_16 = arith.constant dense<0.000000e+00> : vector<8x32xf32>
    %19 = tpu.matmul %18, %5, %cst_16 {dimension_numbers = #tpu.dot_dimension_numbers<[1], [0], [0], [1], [0, 0, 1, 1], [], []>} : vector<8x32xf32>, vector<32x32xf32>, vector<8x32xf32> -> vector<8x32xf32>
    %20 = vector.broadcast %9 : vector<1x32xf32> to vector<8x32xf32>
    %21 = arith.addf %19, %20 : vector<8x32xf32>
    %cst_17 = arith.constant 0.000000e+00 : f32
    %22 = vector.broadcast %cst_17 : f32 to vector<8x32xf32>
    %23 = arith.maximumf %21, %22 : vector<8x32xf32>
    %24 = vector.broadcast %11 : vector<1x32xf32> to vector<8x32xf32>
    %25 = arith.mulf %23, %24 : vector<8x32xf32>
    %cst_18 = arith.constant dense<0.000000e+00> : vector<8xf32>
    %26 = vector.multi_reduction <add>, %25, %cst_18 [1] : vector<8x32xf32> to vector<8xf32>
    %27 = vector.shape_cast %26 : vector<8xf32> to vector<8x1xf32>
    %28 = vector.broadcast %13 : vector<1x1xf32> to vector<8x1xf32>
    %29 = arith.addf %27, %28 : vector<8x1xf32>
    %c0_19 = arith.constant 0 : index
    %c0_20 = arith.constant 0 : index
    %c0_21 = arith.constant 0 : index
    %30 = vector.load %arg4[%c0_19, %c0_20, %c0_21] : memref<1x8x1xf32, #tpu.memory_space<vmem>>, vector<1x8x1xf32>
    %31 = vector.shape_cast %30 : vector<1x8x1xf32> to vector<8x1xf32>
    %32 = vector.shape_cast %29 : vector<8x1xf32> to vector<1x8x1xf32>
    tpu.vector_store %arg4[%c0_19, %c0_20, %c0_21], %32 {strides = array<i32>} : memref<1x8x1xf32, #tpu.memory_space<vmem>>, vector<1x8x1xf32>,
    return
  }
  func.func @transform_0(%arg0: i32, %arg1: memref<4xi32, #tpu.memory_space<smem>>) -> (i32, i32, i32) {
    %c0_i32 = arith.constant 0 : i32
    %c0_i32_0 = arith.constant 0 : i32
    %c0_i32_1 = arith.constant 0 : i32
    return %arg0, %c0_i32, %c0_i32_0 : i32, i32, i32
  }
  func.func @transform_1(%arg0: i32, %arg1: memref<4xi32, #tpu.memory_space<smem>>) -> (i32, i32, i32) {
    %0 = arith.index_cast %arg0 : i32 to index
    %1 = memref.load %arg1[%0] : memref<4xi32, #tpu.memory_space<smem>>
    %c0_i32 = arith.constant 0 : i32
    %c0_i32_0 = arith.constant 0 : i32
    %c0_i32_1 = arith.constant 0 : i32
    return %1, %c0_i32, %c0_i32_0 : i32, i32, i32
  }
  func.func @transform_2(%arg0: i32, %arg1: memref<4xi32, #tpu.memory_space<smem>>) -> (i32, i32, i32) {
    %c0_i32 = arith.constant 0 : i32
    %c0_i32_0 = arith.constant 0 : i32
    %c0_i32_1 = arith.constant 0 : i32
    return %arg0, %c0_i32, %c0_i32_0 : i32, i32, i32
  }
}

</mosaic_0001>

<llo_original>
// kernel: tpu_custom_call.1
$region0: #{tpu_custom_call.1}
  #allocation0 [shape = 'u32[]', space=smem, size = 0x4, offset = 0x4, fixed_abs, tag = 'smem constant byte address 0x4 - core index']
  #allocation1 [shape = 'u32[144,128]{1,0:T(1,128)}', space=vmem, size = 0x12000, scoped, tag = 'internal scratch']
  #allocation2 [shape = 's32[1]{0}', space=sflag, size = 0x4, scoped, tag = 'scoped memory for tpu_custom_call.1']
  #allocation3 [shape = 'u8[512]{0}', space=smem, size = 0x200, scoped, tag = 'prefetched SMEM operand 0']
  %s0 = inlined_call_operand.vmem [shape: s32[4], index: 0, kind: input, shape index: {}]
  %s1 = inlined_call_operand.vmem [shape: f32[4,8,16], index: 1, kind: input, shape index: {}]
  %s2 = inlined_call_operand.vmem [shape: f32[3,56,32], index: 2, kind: input, shape index: {}]
  %s3 = inlined_call_operand.vmem [shape: f32[4,8,1], index: 3, kind: output, shape index: {}]
  %s4 = sld [smem:[#allocation0]]
  $region41: #{tpu_custom_call.1} parent=0
    _
  %s6 = ssub.s32 1, %s4
  %s7 = scalar_select 0, %s6, %s4
  %s8 = sshll.u32 %s0, 4
  %s9 = int_to_ptr.vmem [resolvable:$true] %s8
  %11 = dma.vmem_to_smem %s9, 16, [#allocation3], [#allocation2]
  %12 = dma.done [#allocation2], 16
  %13 = sfence
  loop: start=0, step=1, limit=6
  $region2: #{tpu_custom_call.1} parent=0 // loop_pre_header
    _
  $region3: #{tpu_custom_call.1} parent=0 // loop_header
    %s15 = sphi 0, %s19
    %p16 = scmp.ge.s32.totalorder %s15, 6
    %s25 = sphi 0, %s27
    %s28 = sphi 0, %s25
    %s29 = sphi 0, %s28
    %s45 = sphi 0, %s29
    %s53 = sphi 0, %s55
    %s56 = sphi 0, %s53
    %s57 = sphi 0, %s56
    %s73 = sphi 0, %s57
    %s79 = sphi 0, %s81
    %s82 = sphi 0, %s79
    %s83 = sphi 0, %s82
    %s99 = sphi 0, %s83
  $region4: #{tpu_custom_call.1} parent=0 // loop_header_branch
    %18 = sbr.rel (%p16) target = $region8
  $region5: #{tpu_custom_call.1} parent=0 // loop_body
    %s20 = ssub.s32 %s15, 1
    %s21 = ssub.s32 %s15, 2
    %s22 = sadd.s32 %s15, 1
    %s23 = ssub.s32 %s15, %s22
    %p24 = scmp.eq.s32.totalorder %s23, 0
    %s26 = sadd.s32 %s25, 1
    %s27 = scalar_select %p24, %s25, %s26
    %p30 = pneg %p24
    %p31 = scmp.eq.s32.totalorder %s15, 3
    %p32 = por %p30, %p31
    %p33 = scmp.ne.s32.totalorder %s25, %s28
    %p34 = scmp.eq.s32.totalorder %s15, 0
    %p35 = por %p33, %p34
    %p36 = scmp.ne.s32.totalorder %s25, %s28
    %p37 = scmp.eq.s32.totalorder %s20, 3
    %p38 = por %p36, %p37
    %p39 = scmp.ne.s32.totalorder %s28, %s29
    %p40 = scmp.eq.s32.totalorder %s20, 0
    %p41 = por %p39, %p40
    %p42 = scmp.ne.s32.totalorder %s28, %s29
    %p43 = scmp.eq.s32.totalorder %s21, 3
    %p44 = por %p42, %p43
    %p46 = scmp.ne.s32.totalorder %s29, %s45
    %p47 = scmp.eq.s32.totalorder %s21, 0
    %p48 = por %p46, %p47
    %s49 = sld [smem:[#allocation3 + %s15]]
    %s50 = sld [smem:[#allocation3 + %s22]]
    %s51 = ssub.s32 %s49, %s50
    %p52 = scmp.eq.s32.totalorder %s51, 0
    %s54 = sadd.s32 %s53, 1
    %s55 = scalar_select %p52, %s53, %s54
    %p58 = pneg %p52
    %p59 = scmp.eq.s32.totalorder %s15, 3
    %p60 = por %p58, %p59
    %p61 = scmp.ne.s32.totalorder %s53, %s56
    %p62 = scmp.eq.s32.totalorder %s15, 0
    %p63 = por %p61, %p62
    %p64 = scmp.ne.s32.totalorder %s53, %s56
    %p65 = scmp.eq.s32.totalorder %s20, 3
    %p66 = por %p64, %p65
    %p67 = scmp.ne.s32.totalorder %s56, %s57
    %p68 = scmp.eq.s32.totalorder %s20, 0
    %p69 = por %p67, %p68
    %p70 = scmp.ne.s32.totalorder %s56, %s57
    %p71 = scmp.eq.s32.totalorder %s21, 3
    %p72 = por %p70, %p71
    %p74 = scmp.ne.s32.totalorder %s57, %s73
    %p75 = scmp.eq.s32.totalorder %s21, 0
    %p76 = por %p74, %p75
    %s77 = ssub.s32 %s15, %s22
    %p78 = scmp.eq.s32.totalorder %s77, 0
    %s80 = sadd.s32 %s79, 1
    %s81 = scalar_select %p78, %s79, %s80
    %p84 = pneg %p78
    %p85 = scmp.eq.s32.totalorder %s15, 3
    %p86 = por %p84, %p85
    %p87 = scmp.ne.s32.totalorder %s79, %s82
    %p88 = scmp.eq.s32.totalorder %s15, 0
    %p89 = por %p87, %p88
    %p90 = scmp.ne.s32.totalorder %s79, %s82
    %p91 = scmp.eq.s32.totalorder %s20, 3
    %p92 = por %p90, %p91
    %p93 = scmp.ne.s32.totalorder %s82, %s83
    %p94 = scmp.eq.s32.totalorder %s20, 0
    %p95 = por %p93, %p94
    %p96 = scmp.ne.s32.totalorder %s82, %s83
    %p97 = scmp.eq.s32.totalorder %s21, 3
    %p98 = por %p96, %p97
    %p100 = scmp.ne.s32.totalorder %s83, %s99
    %p101 = scmp.eq.s32.totalorder %s21, 0
    %p102 = por %p100, %p101
    %p103 = scmp.le.s32.totalorder 1, %s15
    %p104 = scmp.lt.s32.totalorder %s15, 5
    %p105 = pnand %p103, %p104
    %p106 = pneg %p105
    // Predicated region
    $region9: #{tpu_custom_call.1} parent=5 // pred_check
      _
    $region10: #{tpu_custom_call.1} parent=5 // pred_check_branch
      %108 = sbr.rel (%p105) target = $region12
    $region11: #{tpu_custom_call.1} parent=5 // pred_region
      %s109 = ssub.s32 %s15, 1
    $region12: #{tpu_custom_call.1} parent=5 // pred_fallthru
      _
    %p110 = scmp.lt.s32.totalorder %s15, 4
    // Predicated region
    $region13: #{tpu_custom_call.1} parent=5 // pred_check
      %p111 = pneg %p110
    $region14: #{tpu_custom_call.1} parent=5 // pred_check_branch
      %113 = sbr.rel (%p111) target = $region16
    $region15: #{tpu_custom_call.1} parent=5 // pred_region
      // Predicated region
      $region17: #{tpu_custom_call.1} parent=15 // pred_check
        %p114 = pneg %p35
      $region18: #{tpu_custom_call.1} parent=15 // pred_check_branch
        %116 = sbr.rel (%p114) target = $region20
      $region19: #{tpu_custom_call.1} parent=15 // pred_region
        %p117 = scmp.lt.s32.totalorder %s15, 3
        %s118 = scalar_select %p117, %s15, 3
        %s119 = smul.addr %s118, 8
        %s120 = scalar_lea.vmem %s1, %s119
      $region20: #{tpu_custom_call.1} parent=15 // pred_fallthru
        _
      // Predicated region
      $region21: #{tpu_custom_call.1} parent=15 // pred_check
        %p121 = pneg %p63
      $region22: #{tpu_custom_call.1} parent=15 // pred_check_branch
        %123 = sbr.rel (%p121) target = $region24
      $region23: #{tpu_custom_call.1} parent=15 // pred_region
        %s124 = sld [smem:[#allocation3 + %s15]]
        %p125 = scmp.lt.s32.totalorder %s124, 2
        %s126 = scalar_select %p125, %s124, 2
        %s127 = smul.addr %s126, 7
        %s128 = smul.addr %s127, 8
        %s129 = scalar_lea.vmem %s2, %s128
        %s130 = sld [smem:[#allocation3 + %s15]]
      $region24: #{tpu_custom_call.1} parent=15 // pred_fallthru
        _
    $region16: #{tpu_custom_call.1} parent=5 // pred_fallthru
      _
    %p131 = scmp.le.s32.totalorder 1, %s15
    %p132 = scmp.lt.s32.totalorder %s15, 5
    %p133 = pnand %p131, %p132
    %p134 = pneg %p133
    // Predicated region
    $region25: #{tpu_custom_call.1} parent=5 // pred_check
      _
    $region26: #{tpu_custom_call.1} parent=5 // pred_check_branch
      %136 = sbr.rel (%p133) target = $region28
    $region27: #{tpu_custom_call.1} parent=5 // pred_region
      %s137 = ssub.s32 %s15, 1
      %p138 = scmp.lt.s32.totalorder %s20, 3
      %s139 = scalar_select %p138, %s20, 3
      %s140 = smul.addr %s139, 8
      %s141 = scalar_lea.vmem %s1, %s140
      %p142 = pneg %p41
      %p143 = pneg %p38
      %s144 = sld [smem:[#allocation3 + %s20]]
      %p145 = scmp.lt.s32.totalorder %s144, 2
      %s146 = scalar_select %p145, %s144, 2
      %s147 = smul.addr %s146, 7
      %s148 = smul.addr %s147, 8
      %s149 = scalar_lea.vmem %s2, %s148
      %p150 = pneg %p69
      %p151 = pneg %p66
      %p152 = pneg %p95
      %p153 = pneg %p92
      %p154 = scmp.lt.s32.totalorder %s20, 3
      %s155 = scalar_select %p154, %s20, 3
      %s156 = smul.addr %s155, 8
      %s157 = scalar_lea.vmem %s3, %s156
      %p158 = scmp.lt.s32.totalorder %s20, 3
      %s159 = scalar_select %p158, %s20, 3
      %s160 = smul.addr %s159, 8
      %s161 = scalar_lea.vmem %s1, %s160
      %s162 = sld [smem:[#allocation3 + %s20]]
      %p163 = scmp.lt.s32.totalorder %s162, 2
      %s164 = scalar_select %p163, %s162, 2
      %s165 = smul.addr %s164, 7
      %s166 = smul.addr %s165, 8
      %s167 = scalar_lea.vmem %s2, %s166
      %s168 = sld [smem:[#allocation3 + %s20]]
      %p169 = scmp.lt.s32.totalorder %s20, 3
      %s170 = scalar_select %p169, %s20, 3
      %s171 = smul.addr %s170, 8
      %s172 = scalar_lea.vmem %s3, %s171
      %v173 = vld [vmem:[%s161] sm:$0xff]
      %v174 = vld [vmem:[%s167] sm:$0xff]
      %v175 = vld [vmem:[%s167 + $0x8] sm:$0xff]
      %v176 = vld [vmem:[%s167 + $0x10] sm:$0xff]
      %v177 = vld [vmem:[%s167 + $0x18] sm:$0xff]
      %v178 = vld [vmem:[%s167 + $0x20] sm:$0xff]
      %v179 = vld [vmem:[%s167 + $0x28] sm:$0xff]
      %v180 = vld [vmem:[%s167 + $0x30] sm:$0x1]
      %v181 = vld [vmem:[%s167 + $0x31] sm:$0x1]
      %v182 = vld [vmem:[%s167 + $0x32] sm:$0x1]
      %v183 = vld [vmem:[%s167 + $0x33] sm:$0x1]
      %v184 = vlaneseq
      %v185 = vshrl.u32 %v184, 7
      %v186 = vsub.s32 0, %v185
      %v187 = vrot.slane %v180, %v186
      %vm188 = vcmask 130048
      %v190 = vsel %vm188, %v173, 0
      %192 = vmatprep.subr.mxu0 0.0
      %193 = vmatpush1.msra.mxu0 %v174
      %194 = vmatprep.subr.mxu0 0.0
      %195 = vmatpush1.msra.mxu0 %v175
      %196 = vmatprep.subr.mxu0 0.0
      %197 = vmatpush1.msra.mxu0 0.0
      %198 = vmatprep.subr.mxu0 0.0
      %199 = vmatpush1.msra.mxu0 0.0
      %200 = vmatprep.subr.mxu0 0.0
      %201 = vmatpush1.msra.mxu0 0.0
      %202 = vmatprep.subr.mxu0 0.0
      %203 = vmatpush1.msra.mxu0 0.0
      %204 = vmatprep.subr.mxu0 0.0
      %205 = vmatpush1.msra.mxu0 0.0
      %206 = vmatprep.subr.mxu0 0.0
      %207 = vmatpush1.msra.mxu0 0.0
      %208 = vmatprep.subr.mxu0 0.0
      %209 = vmatpush1.msra.mxu0 0.0
      %210 = vmatprep.subr.mxu0 0.0
      %211 = vmatpush1.msra.mxu0 0.0
      %212 = vmatprep.subr.mxu0 0.0
      %213 = vmatpush1.msra.mxu0 0.0
      %214 = vmatprep.subr.mxu0 0.0
      %215 = vmatpush1.msra.mxu0 0.0
      %216 = vmatprep.subr.mxu0 0.0
      %217 = vmatpush1.msra.mxu0 0.0
      %218 = vmatprep.subr.mxu0 0.0
      %219 = vmatpush1.msra.mxu0 0.0
      %220 = vmatprep.subr.mxu0 0.0
      %221 = vmatpush1.msra.mxu0 0.0
      %222 = vmatprep.subr.mxu0 0.0
      %223 = vmatpush1.msra.mxu0 0.0
      %224 = vmatprep.subr.mxu0 0.0
      %225 = vmatpush1.msra.mxu0 0.0
      %226 = vmatprep.subr.mxu0 0.0
      %227 = vmatpush1.msra.mxu0 0.0
      %228 = vmatprep.subr.mxu0 0.0
      %229 = vmatpush1.msra.mxu0 0.0
      %230 = vmatprep.subr.mxu0 0.0
      %231 = vmatpush1.msra.mxu0 0.0
      %232 = vmatprep.subr.mxu0 0.0
      %233 = vmatpush1.msra.mxu0 0.0
      %234 = vmatprep.subr.mxu0 0.0
      %235 = vmatpush1.msra.mxu0 0.0
      %236 = vmatprep.subr.mxu0 0.0
      %237 = vmatpush1.msra.mxu0 0.0
      %238 = vmatprep.subr.mxu0 0.0
      %239 = vmatpush1.msra.mxu0 0.0
      %240 = vmatprep.subr.mxu0 0.0
      %241 = vmatpush1.msra.mxu0 0.0
      %242 = vmatprep.subr.mxu0 0.0
      %243 = vmatpush1.msra.mxu0 0.0
      %244 = vmatprep.subr.mxu0 0.0
      %245 = vmatpush1.msra.mxu0 0.0
      %246 = vmatprep.subr.mxu0 0.0
      %247 = vmatpush1.msra.mxu0 0.0
      %248 = vmatprep.subr.mxu0 0.0
      %249 = vmatpush1.msra.mxu0 0.0
      %250 = vmatprep.subr.mxu0 0.0
      %251 = vmatpush1.msra.mxu0 0.0
      %252 = vmatprep.subr.mxu0 0.0
      %253 = vmatpush1.msra.mxu0 0.0
      %254 = vmatprep.subr.mxu0 0.0
      %255 = vmatpush1.msra.mxu0 0.0
      %256 = vmatprep.mubr.f32.mxu0 0.0
      %257 = vmatmul.mubr.f32.gmra.mrb[0].mxu0 %v190
      %v258 = vpop.f32.mrb[0].mxu0
      %v259 = vadd.f32 %v187, %v258
      %v260 = vpop.f32.mrb[0].mxu0
      %261 = vdwg.mxu0
      %v262 = vmax.f32 %v259, 0.0
      %v263 = vlaneseq
      %v264 = vshrl.u32 %v263, 7
      %v265 = vsub.s32 0, %v264
      %v266 = vrot.slane %v181, %v265
      %vm267 = vcmask 261120
      %v269 = vsel %vm267, %v262, 0
      %271 = vmatprep.subr.mxu0 0.0
      %272 = vmatpush1.msra.mxu0 %v176
      %273 = vmatprep.subr.mxu0 0.0
      %274 = vmatpush1.msra.mxu0 %v177
      %275 = vmatprep.subr.mxu0 0.0
      %276 = vmatpush1.msra.mxu0 %v178
      %277 = vmatprep.subr.mxu0 0.0
      %278 = vmatpush1.msra.mxu0 %v179
      %279 = vmatprep.subr.mxu0 0.0
      %280 = vmatpush1.msra.mxu0 0.0
      %281 = vmatprep.subr.mxu0 0.0
      %282 = vmatpush1.msra.mxu0 0.0
      %283 = vmatprep.subr.mxu0 0.0
      %284 = vmatpush1.msra.mxu0 0.0
      %285 = vmatprep.subr.mxu0 0.0
      %286 = vmatpush1.msra.mxu0 0.0
      %287 = vmatprep.subr.mxu0 0.0
      %288 = vmatpush1.msra.mxu0 0.0
      %289 = vmatprep.subr.mxu0 0.0
      %290 = vmatpush1.msra.mxu0 0.0
      %291 = vmatprep.subr.mxu0 0.0
      %292 = vmatpush1.msra.mxu0 0.0
      %293 = vmatprep.subr.mxu0 0.0
      %294 = vmatpush1.msra.mxu0 0.0
      %295 = vmatprep.subr.mxu0 0.0
      %296 = vmatpush1.msra.mxu0 0.0
      %297 = vmatprep.subr.mxu0 0.0
      %298 = vmatpush1.msra.mxu0 0.0
      %299 = vmatprep.subr.mxu0 0.0
      %300 = vmatpush1.msra.mxu0 0.0
      %301 = vmatprep.subr.mxu0 0.0
      %302 = vmatpush1.msra.mxu0 0.0
      %303 = vmatprep.subr.mxu0 0.0
      %304 = vmatpush1.msra.mxu0 0.0
      %305 = vmatprep.subr.mxu0 0.0
      %306 = vmatpush1.msra.mxu0 0.0
      %307 = vmatprep.subr.mxu0 0.0
      %308 = vmatpush1.msra.mxu0 0.0
      %309 = vmatprep.subr.mxu0 0.0
      %310 = vmatpush1.msra.mxu0 0.0
      %311 = vmatprep.subr.mxu0 0.0
      %312 = vmatpush1.msra.mxu0 0.0
      %313 = vmatprep.subr.mxu0 0.0
      %314 = vmatpush1.msra.mxu0 0.0
      %315 = vmatprep.subr.mxu0 0.0
      %316 = vmatpush1.msra.mxu0 0.0
      %317 = vmatprep.subr.mxu0 0.0
      %318 = vmatpush1.msra.mxu0 0.0
      %319 = vmatprep.subr.mxu0 0.0
      %320 = vmatpush1.msra.mxu0 0.0
      %321 = vmatprep.subr.mxu0 0.0
      %322 = vmatpush1.msra.mxu0 0.0
      %323 = vmatprep.subr.mxu0 0.0
      %324 = vmatpush1.msra.mxu0 0.0
      %325 = vmatprep.subr.mxu0 0.0
      %326 = vmatpush1.msra.mxu0 0.0
      %327 = vmatprep.subr.mxu0 0.0
      %328 = vmatpush1.msra.mxu0 0.0
      %329 = vmatprep.subr.mxu0 0.0
      %330 = vmatpush1.msra.mxu0 0.0
      %331 = vmatprep.subr.mxu0 0.0
      %332 = vmatpush1.msra.mxu0 0.0
      %333 = vmatprep.subr.mxu0 0.0
      %334 = vmatpush1.msra.mxu0 0.0
      %335 = vmatprep.mubr.f32.mxu0 0.0
      %336 = vmatmul.mubr.f32.gmra.mrb[0].mxu0 %v269
      %v337 = vpop.f32.mrb[0].mxu0
      %v338 = vadd.f32 %v266, %v337
      %v339 = vpop.f32.mrb[0].mxu0
      %340 = vdwg.mxu0
      %v341 = vmax.f32 %v338, 0.0
      %v342 = vlaneseq
      %v343 = vshrl.u32 %v342, 7
      %v344 = vsub.s32 0, %v343
      %v345 = vrot.slane %v182, %v344
      %v346 = vmul.f32 %v341, %v345
      %v347 = vsel %vm267, %v346, 0.0
      %348 = vadd.xlane.f32.xlu0 %v347
      %v349 = vpop.xlane.xlu0 %348
      %v350 = vlaneseq
      %v351 = vshrl.u32 %v350, 7
      %v352 = vsub.s32 0, %v351
      %v353 = vrot.slane %v183, %v352
      %v354 = vadd.f32 %v349, %v353
      %vm355 = vcmask 7168
      %356 = vst.msk [vmem:[%s172] sm:$0xff] %vm355, %v354
      %p357 = scmp.lt.s32.totalorder %s20, 3
      %s358 = scalar_select %p357, %s20, 3
      %s359 = smul.addr %s358, 8
      %s360 = scalar_lea.vmem %s3, %s359
      // Predicated region
      $region29: #{tpu_custom_call.1} parent=27 // pred_check
        %p361 = pneg %p92
      $region30: #{tpu_custom_call.1} parent=27 // pred_check_branch
        %363 = sbr.rel (%p361) target = $region32
      $region31: #{tpu_custom_call.1} parent=27 // pred_region
        _
      $region32: #{tpu_custom_call.1} parent=27 // pred_fallthru
        _
    $region28: #{tpu_custom_call.1} parent=5 // pred_fallthru
      _
    %p364 = scmp.le.s32.totalorder 2, %s15
    // Predicated region
    $region33: #{tpu_custom_call.1} parent=5 // pred_check
      %p365 = pneg %p364
    $region34: #{tpu_custom_call.1} parent=5 // pred_check_branch
      %367 = sbr.rel (%p365) target = $region36
    $region35: #{tpu_custom_call.1} parent=5 // pred_region
      %s368 = ssub.s32 %s15, 2
      // Predicated region
      $region37: #{tpu_custom_call.1} parent=35 // pred_check
        %p369 = pneg %p98
      $region38: #{tpu_custom_call.1} parent=35 // pred_check_branch
        %371 = sbr.rel (%p369) target = $region40
      $region39: #{tpu_custom_call.1} parent=35 // pred_region
        %p372 = scmp.lt.s32.totalorder %s21, 3
        %s373 = scalar_select %p372, %s21, 3
        %s374 = smul.addr %s373, 8
        %s375 = scalar_lea.vmem %s3, %s374
      $region40: #{tpu_custom_call.1} parent=35 // pred_fallthru
        _
    $region36: #{tpu_custom_call.1} parent=5 // pred_fallthru
      _
  $region6: #{tpu_custom_call.1} parent=0 // loop_footer
    %s19 = sadd.s32 1, %s15
  $region7: #{tpu_custom_call.1} parent=0 // loop_footer_branch
    %14 = sbr.rel target = $region3
  $region8: #{tpu_custom_call.1} parent=0 // loop_exit
    _

</llo_original>
